<compile_context>
chip_gen: v7x
topology: tpu7x:2x2x1
jax: 0.10.0
libtpu: 0.0.40
codegen_flags: <defaults>
</compile_context>

<pallas_src>
import functools
import math

import jax
import jax.numpy as jnp
from jax.experimental import pallas as pl
from jax.experimental.pallas import tpu as pltpu

# BERT.py globals (head dims). Small synthetic values for this script.
d_k = 16
d_v = 16


def _sdpa_kernel(q_ref, k_ref, v_ref, m_ref, ctx_ref, attn_ref, *, scale, g):
    # q_ref: (G, tq, dk)   k_ref: (G, S, dk)   v_ref: (G, S, dv)
    # m_ref: (G, 1 or tq, S) int8, nonzero == mask out
    # ctx_ref: (1, tq, G*dv) lane-dense slab   attn_ref: (G, tq, S)
    q = q_ref[...]
    k = k_ref[...]
    v = v_ref[...]
    m = m_ref[...]

    # scores = Q @ K^T / sqrt(d_k); batched over heads, contraction on the head
    # dim (no explicit transpose -> K stays on the MXU feed path).
    scores = jax.lax.dot_general(
        q, k,
        dimension_numbers=(((2,), (2,)), ((0,), (0,))),
        preferred_element_type=jnp.float32,
    ) * scale                                              # (G, tq, S) f32

    # masked_fill_(attn_mask, -1e9); compact masks broadcast over queries.
    scores = jnp.where(m != 0, jnp.float32(-1.0e9), scores)

    # Numerically stable softmax along the key axis (matches nn.Softmax).
    mx = jnp.max(scores, axis=-1, keepdims=True)
    p = jnp.exp(scores - mx)
    denom = jnp.sum(p, axis=-1, keepdims=True)
    attn = p * pl.reciprocal(denom, approx=True)

    attn_ref[...] = attn.astype(attn_ref.dtype)

    # context = attn @ V, emitted as a lane-dense (tq, G*dv) slab.
    attn_mm = attn.astype(v.dtype)
    parts = [
        jnp.dot(attn_mm[h], v[h], preferred_element_type=jnp.float32)
        for h in range(g)
    ]
    ctx = parts[0] if g == 1 else jnp.concatenate(parts, axis=-1)
    ctx_ref[0] = ctx.astype(ctx_ref.dtype)


def _choose_heads_per_step(bh, dv):
    """Largest divisor of B*H such that G*dv stays near a 128-lane slab."""
    cap = max(1, 128 // max(dv, 1))
    cap = min(cap, bh, 8)
    g = 1
    for cand in range(cap, 0, -1):
        if bh % cand == 0:
            g = cand
            break
    # Prefer >= 2 grid steps along the head axis (v7x has 2 TensorCores).
    if g > 1 and bh // g < 2:
        for cand in range(g - 1, 0, -1):
            if bh % cand == 0 and bh // cand >= 2:
                g = cand
                break
    return g


def _choose_query_tile(s):
    """Query tile so the per-step O(tq*S) tiles stay within VMEM budgets."""
    if s <= 512:
        return s
    for t in (512, 256, 128, 64, 32, 16, 8):
        if s % t == 0:
            return t
    return s


def scaled_dot_product_attention(Q, K, V, attn_mask):
    """Pallas forward of BERT's ScaledDotProductAttention.

    Q, K: [B, H, S, d_k]; V: [B, H, S, d_v].
    attn_mask: nonzero/True == mask out.  Accepts [S], [B, S], [B, Sq, S] or a
    4-D shape broadcastable to [B, H, Sq, S] with Sq in {1, S}.  Key-padding
    masks (Sq == 1, the BERT case) take the compact path with no O(S^2) mask
    DMA.  Returns (context [B,H,S,d_v], attn [B,H,S,S]) like the PyTorch module.
    """
    B, H, S, dk = Q.shape
    dv = V.shape[-1]
    BH = B * H

    q = Q.reshape(BH, S, dk)
    k = K.reshape(BH, S, dk)
    v = V.reshape(BH, S, dv)

    m = jnp.asarray(attn_mask)
    if m.ndim == 1:                      # [S]
        m = m[None, None, None, :]
    elif m.ndim == 2:                    # [B, S] key-padding
        m = m[:, None, None, :]
    elif m.ndim == 3:                    # [B, Sq, S]
        m = m[:, None, :, :]
    sq = m.shape[2]
    m = jnp.broadcast_to(m, (B, H, sq, S)).astype(jnp.int8).reshape(BH, sq, S)

    G = _choose_heads_per_step(BH, dv)
    tq = _choose_query_tile(S)
    grid = (BH // G, S // tq)

    if sq == 1:   # compact key-padding mask: no O(S^2) mask traffic
        m_spec = pl.BlockSpec((G, 1, S), lambda i, j: (i, 0, 0))
    else:         # general query-dependent mask (fallback)
        m_spec = pl.BlockSpec((G, tq, S), lambda i, j: (i, j, 0))

    scale = 1.0 / math.sqrt(dk)
    kernel = functools.partial(_sdpa_kernel, scale=scale, g=G)

    # Rough per-step VMEM estimate: double-buffered IO + f32 intermediates.
    itemsize = jnp.dtype(Q.dtype).itemsize
    io_bytes = (G * tq * dk + G * S * dk + G * S * dv
                + G * tq * S + tq * G * dv) * itemsize + G * sq * S
    est = 2 * io_bytes + 3 * G * tq * S * 4
    vmem_limit = int(min(max(est + (8 << 20), 32 << 20), 48 << 20))

    ctx_slab, attn = pl.pallas_call(
        kernel,
        out_shape=(
            jax.ShapeDtypeStruct((BH // G, S, G * dv), Q.dtype),
            jax.ShapeDtypeStruct((BH, S, S), Q.dtype),
        ),
        grid_spec=pltpu.PrefetchScalarGridSpec(
            num_scalar_prefetch=0,
            grid=grid,
            in_specs=[
                pl.BlockSpec((G, tq, dk), lambda i, j: (i, j, 0)),
                pl.BlockSpec((G, S, dk), lambda i, j: (i, 0, 0)),
                pl.BlockSpec((G, S, dv), lambda i, j: (i, 0, 0)),
                m_spec,
            ],
            out_specs=[
                pl.BlockSpec((1, tq, G * dv), lambda i, j: (i, j, 0)),
                pl.BlockSpec((G, tq, S), lambda i, j: (i, j, 0)),
            ],
        ),
        compiler_params=pltpu.CompilerParams(
            dimension_semantics=("parallel", "parallel"),
            vmem_limit_bytes=vmem_limit,
        ),
    )(q, k, v, m)

    ctx = (ctx_slab.reshape(BH // G, S, G, dv)
           .transpose(0, 2, 1, 3)
           .reshape(B, H, S, dv))
    return ctx, attn.reshape(B, H, S, S)


def _reference(Q, K, V, attn_mask):
    scores = jnp.einsum("bhqd,bhkd->bhqk", Q, K) / math.sqrt(Q.shape[-1])
    scores = jnp.where(attn_mask, -1.0e9, scores)
    attn = jax.nn.softmax(scores, axis=-1)
    context = jnp.einsum("bhqk,bhkd->bhqd", attn, V)
    return context, attn


if __name__ == "__main__":
    B, H, S = 2, 2, 8
    key = jax.random.PRNGKey(0)
    kq, kk, kv, km = jax.random.split(key, 4)

    Q = jax.random.normal(kq, (B, H, S, d_k), dtype=jnp.float32)
    K = jax.random.normal(kk, (B, H, S, d_k), dtype=jnp.float32)
    V = jax.random.normal(kv, (B, H, S, d_v), dtype=jnp.float32)

    # BERT-style key-padding mask (True == masked out).
    pad = jax.random.bernoulli(km, p=0.25, shape=(B, 1, 1, S))
    full_mask = jnp.broadcast_to(pad, (B, H, S, S))

    # Compact padding-mask path (the BERT case).
    ctx, attn = scaled_dot_product_attention(Q, K, V, pad)
    # General full-mask fallback path (same semantics as the PyTorch module).
    ctx2, attn2 = scaled_dot_product_attention(Q, K, V, full_mask)
    jax.block_until_ready((ctx, attn, ctx2, attn2))

    ctx_exp, attn_exp = _reference(Q, K, V, full_mask)
    assert jnp.allclose(ctx, ctx_exp, atol=2e-3, rtol=2e-3)
    assert jnp.allclose(attn, attn_exp, atol=2e-3, rtol=2e-3)
    assert jnp.allclose(ctx2, ctx_exp, atol=2e-3, rtol=2e-3)
    assert jnp.allclose(attn2, attn_exp, atol=2e-3, rtol=2e-3)

    print("KERNEL_OK")
</pallas_src>

<mosaic_0001>
module attributes {stable_mosaic.version = 11 : i64} {
  func.func @_sdpa_kernel(%arg0: i32, %arg1: i32, %arg2: memref<2x8x16xf32, #tpu.memory_space<vmem>>, %arg3: memref<2x8x16xf32, #tpu.memory_space<vmem>>, %arg4: memref<2x8x16xf32, #tpu.memory_space<vmem>>, %arg5: memref<2x1x8xi8, #tpu.memory_space<vmem>>, %arg6: memref<1x8x32xf32, #tpu.memory_space<vmem>>, %arg7: memref<2x8x8xf32, #tpu.memory_space<vmem>>) attributes {dimension_semantics = [#tpu.dimension_semantics<parallel>, #tpu.dimension_semantics<parallel>], iteration_bounds = array<i64: 2, 1>, scalar_prefetch = 0 : i64, scratch_operands = 0 : i64, tpu.core_type = #tpu.core_type<tc>, window_params = [{transform_indices = @transform_0, window_bounds = array<i64: 2, 8, 16>}, {transform_indices = @transform_1, window_bounds = array<i64: 2, 8, 16>}, {transform_indices = @transform_2, window_bounds = array<i64: 2, 8, 16>}, {transform_indices = @transform_3, window_bounds = array<i64: 2, 1, 8>}, {transform_indices = @transform_4, window_bounds = array<i64: 1, 8, 32>}, {transform_indices = @transform_5, window_bounds = array<i64: 2, 8, 8>}]} {
    %c0 = arith.constant 0 : index
    %c0_0 = arith.constant 0 : index
    %c0_1 = arith.constant 0 : index
    %0 = vector.load %arg2[%c0, %c0_0, %c0_1] : memref<2x8x16xf32, #tpu.memory_space<vmem>>, vector<2x8x16xf32>
    %c0_2 = arith.constant 0 : index
    %c0_3 = arith.constant 0 : index
    %c0_4 = arith.constant 0 : index
    %1 = vector.load %arg3[%c0_2, %c0_3, %c0_4] : memref<2x8x16xf32, #tpu.memory_space<vmem>>, vector<2x8x16xf32>
    %c0_5 = arith.constant 0 : index
    %c0_6 = arith.constant 0 : index
    %c0_7 = arith.constant 0 : index
    %2 = vector.load %arg4[%c0_5, %c0_6, %c0_7] : memref<2x8x16xf32, #tpu.memory_space<vmem>>, vector<2x8x16xf32>
    %c0_8 = arith.constant 0 : index
    %c0_9 = arith.constant 0 : index
    %c0_10 = arith.constant 0 : index
    %3 = vector.load %arg5[%c0_8, %c0_9, %c0_10] : memref<2x1x8xi8, #tpu.memory_space<vmem>>, vector<2x1x8xi8>
    %cst = arith.constant dense<0.000000e+00> : vector<2x8x8xf32>
    %4 = tpu.matmul %0, %1, %cst {dimension_numbers = #tpu.dot_dimension_numbers<[2], [2], [1], [1], [0, 0, 0, 1, 1, 1], [0], [0]>} : vector<2x8x16xf32>, vector<2x8x16xf32>, vector<2x8x8xf32> -> vector<2x8x8xf32>
    %cst_11 = arith.constant 2.500000e-01 : f32
    %5 = vector.broadcast %cst_11 : f32 to vector<2x8x8xf32>
    %6 = arith.mulf %4, %5 : vector<2x8x8xf32>
    %c0_i8 = arith.constant 0 : i8
    %7 = vector.broadcast %c0_i8 : i8 to vector<2x1x8xi8>
    %8 = arith.cmpi ne, %3, %7 : vector<2x1x8xi8>
    %cst_12 = arith.constant -1.000000e+09 : f32
    %9 = vector.shape_cast %8 : vector<2x1x8xi1> to vector<2x1x8xi1>
    %10 = vector.broadcast %9 : vector<2x1x8xi1> to vector<2x8x8xi1>
    %11 = vector.broadcast %cst_12 : f32 to vector<2x8x8xf32>
    %12 = arith.select %10, %11, %6 : vector<2x8x8xi1>, vector<2x8x8xf32>
    %cst_13 = arith.constant dense<0xFF800000> : vector<2x8xf32>
    %13 = vector.multi_reduction <maximumf>, %12, %cst_13 [2] : vector<2x8x8xf32> to vector<2x8xf32>
    %14 = vector.shape_cast %13 : vector<2x8xf32> to vector<2x8x1xf32>
    %15 = vector.broadcast %14 : vector<2x8x1xf32> to vector<2x8x8xf32>
    %16 = arith.subf %12, %15 : vector<2x8x8xf32>
    %17 = math.exp %16 : vector<2x8x8xf32>
    %cst_14 = arith.constant dense<0.000000e+00> : vector<2x8xf32>
    %18 = vector.multi_reduction <add>, %17, %cst_14 [2] : vector<2x8x8xf32> to vector<2x8xf32>
    %19 = vector.shape_cast %18 : vector<2x8xf32> to vector<2x8x1xf32>
    %20 = tpu.reciprocal %19 {approx = true} : vector<2x8x1xf32> -> vector<2x8x1xf32>
    %21 = vector.broadcast %20 : vector<2x8x1xf32> to vector<2x8x8xf32>
    %22 = arith.mulf %17, %21 : vector<2x8x8xf32>
    %c0_15 = arith.constant 0 : index
    %c0_16 = arith.constant 0 : index
    %c0_17 = arith.constant 0 : index
    %23 = vector.load %arg7[%c0_15, %c0_16, %c0_17] : memref<2x8x8xf32, #tpu.memory_space<vmem>>, vector<2x8x8xf32>
    tpu.vector_store %arg7[%c0_15, %c0_16, %c0_17], %22 {strides = array<i32>} : memref<2x8x8xf32, #tpu.memory_space<vmem>>, vector<2x8x8xf32>,
    %24 = vector.extract_strided_slice %22 {offsets = [0, 0, 0], sizes = [1, 8, 8], strides = [1, 1, 1]} : vector<2x8x8xf32> to vector<1x8x8xf32>
    %25 = vector.shape_cast %24 : vector<1x8x8xf32> to vector<8x8xf32>
    %26 = vector.extract_strided_slice %2 {offsets = [0, 0, 0], sizes = [1, 8, 16], strides = [1, 1, 1]} : vector<2x8x16xf32> to vector<1x8x16xf32>
    %27 = vector.shape_cast %26 : vector<1x8x16xf32> to vector<8x16xf32>
    %cst_18 = arith.constant dense<0.000000e+00> : vector<8x16xf32>
    %28 = tpu.matmul %25, %27, %cst_18 {dimension_numbers = #tpu.dot_dimension_numbers<[1], [0], [0], [1], [0, 0, 1, 1], [], []>} : vector<8x8xf32>, vector<8x16xf32>, vector<8x16xf32> -> vector<8x16xf32>
    %29 = vector.extract_strided_slice %22 {offsets = [1, 0, 0], sizes = [1, 8, 8], strides = [1, 1, 1]} : vector<2x8x8xf32> to vector<1x8x8xf32>
    %30 = vector.shape_cast %29 : vector<1x8x8xf32> to vector<8x8xf32>
    %31 = vector.extract_strided_slice %2 {offsets = [1, 0, 0], sizes = [1, 8, 16], strides = [1, 1, 1]} : vector<2x8x16xf32> to vector<1x8x16xf32>
    %32 = vector.shape_cast %31 : vector<1x8x16xf32> to vector<8x16xf32>
    %cst_19 = arith.constant dense<0.000000e+00> : vector<8x16xf32>
    %33 = tpu.matmul %30, %32, %cst_19 {dimension_numbers = #tpu.dot_dimension_numbers<[1], [0], [0], [1], [0, 0, 1, 1], [], []>} : vector<8x8xf32>, vector<8x16xf32>, vector<8x16xf32> -> vector<8x16xf32>
    %34 = tpu.concatenate %28, %33 in 1 : vector<8x16xf32>, vector<8x16xf32> -> vector<8x32xf32>
    %c0_20 = arith.constant 0 : index
    %c0_21 = arith.constant 0 : index
    %c0_22 = arith.constant 0 : index
    %35 = vector.load %arg6[%c0_20, %c0_21, %c0_22] : memref<1x8x32xf32, #tpu.memory_space<vmem>>, vector<1x8x32xf32>
    %36 = vector.shape_cast %35 : vector<1x8x32xf32> to vector<8x32xf32>
    %37 = vector.shape_cast %34 : vector<8x32xf32> to vector<1x8x32xf32>
    tpu.vector_store %arg6[%c0_20, %c0_21, %c0_22], %37 {strides = array<i32>} : memref<1x8x32xf32, #tpu.memory_space<vmem>>, vector<1x8x32xf32>,
    return
  }
  func.func @transform_0(%arg0: i32, %arg1: i32) -> (i32, i32, i32) {
    %c0_i32 = arith.constant 0 : i32
    %c0_i32_0 = arith.constant 0 : i32
    return %arg0, %arg1, %c0_i32 : i32, i32, i32
  }
  func.func @transform_1(%arg0: i32, %arg1: i32) -> (i32, i32, i32) {
    %c0_i32 = arith.constant 0 : i32
    %c0_i32_0 = arith.constant 0 : i32
    %c0_i32_1 = arith.constant 0 : i32
    return %arg0, %c0_i32, %c0_i32_0 : i32, i32, i32
  }
  func.func @transform_2(%arg0: i32, %arg1: i32) -> (i32, i32, i32) {
    %c0_i32 = arith.constant 0 : i32
    %c0_i32_0 = arith.constant 0 : i32
    %c0_i32_1 = arith.constant 0 : i32
    return %arg0, %c0_i32, %c0_i32_0 : i32, i32, i32
  }
  func.func @transform_3(%arg0: i32, %arg1: i32) -> (i32, i32, i32) {
    %c0_i32 = arith.constant 0 : i32
    %c0_i32_0 = arith.constant 0 : i32
    %c0_i32_1 = arith.constant 0 : i32
    return %arg0, %c0_i32, %c0_i32_0 : i32, i32, i32
  }
  func.func @transform_4(%arg0: i32, %arg1: i32) -> (i32, i32, i32) {
    %c0_i32 = arith.constant 0 : i32
    %c0_i32_0 = arith.constant 0 : i32
    return %arg0, %arg1, %c0_i32 : i32, i32, i32
  }
  func.func @transform_5(%arg0: i32, %arg1: i32) -> (i32, i32, i32) {
    %c0_i32 = arith.constant 0 : i32
    %c0_i32_0 = arith.constant 0 : i32
    return %arg0, %arg1, %c0_i32 : i32, i32, i32
  }
}

</mosaic_0001>

<llo_original>
// kernel: tpu_custom_call.1
$region0: #{tpu_custom_call.1}
  #allocation0 [shape = 'u32[]', space=smem, size = 0x4, offset = 0x4, fixed_abs, tag = 'smem constant byte address 0x4 - core index']
  #allocation1 [shape = 'u32[144,128]{1,0:T(1,128)}', space=vmem, size = 0x12000, scoped, tag = 'internal scratch']
  %s0 = inlined_call_operand.hbm [shape: f32[4,8,16], index: 0, kind: input, shape index: {}]
  %s1 = inlined_call_operand.hbm [shape: f32[4,8,16], index: 1, kind: input, shape index: {}]
  %s2 = inlined_call_operand.hbm [shape: f32[4,8,16], index: 2, kind: input, shape index: {}]
  %s3 = inlined_call_operand.vmem [shape: s8[4,1,8], index: 3, kind: input, shape index: {}]
  %s4 = inlined_call_operand.hbm [shape: f32[2,8,32], index: 4, kind: output, shape index: {0}]
  %s5 = inlined_call_operand.hbm [shape: f32[4,8,8], index: 5, kind: output, shape index: {1}]
  %6 = xla_tuple %s4, %s5
  %s7 = sld [smem:[#allocation0]]
  $region69: #{tpu_custom_call.1} parent=0
    _
  %s9 = ssub.s32 1, %s7
  %s10 = scalar_select 0, %s9, %s7
  $region1: #{tpu_custom_call.1} parent=0
    #allocation2 [shape = 'u8[16384]{0}', space=vmem, size = 0x4000, scoped, tag = 'input window, operand 0']
    #allocation3 [shape = 's32[2]{0}', space=sflag, size = 0x8, scoped, tag = 'scoped memory for tpu_custom_call.1']
    #allocation4 [shape = 's32[2]{0}', space=sflag, size = 0x8, scoped, tag = 'scoped memory for tpu_custom_call.1']
    #allocation5 [shape = 'u8[16384]{0}', space=vmem, size = 0x4000, scoped, tag = 'input window, operand 1']
    #allocation6 [shape = 's32[2]{0}', space=sflag, size = 0x8, scoped, tag = 'scoped memory for tpu_custom_call.1']
    #allocation7 [shape = 'u8[16384]{0}', space=vmem, size = 0x4000, scoped, tag = 'input window, operand 2']
    #allocation8 [shape = 'u8[8192]{0}', space=vmem, size = 0x2000, scoped, tag = 'output window, operand 0']
    #allocation9 [shape = 'u8[16384]{0}', space=vmem, size = 0x4000, scoped, tag = 'output window, operand 1']
    #allocation10 [shape = 's32[2]{0}', space=sflag, size = 0x8, scoped, tag = 'scoped memory for tpu_custom_call.1']
    %11 = vsyncpa [#allocation3], 0
    %s12 = scalar_lea.sflag [#allocation3], 1
    %13 = vsyncpa %s12, 0
    %14 = vsyncpa [#allocation6], 0
    %s15 = scalar_lea.sflag [#allocation6], 1
    %16 = vsyncpa %s15, 0
    %17 = vsyncpa [#allocation4], 0
    %s18 = scalar_lea.sflag [#allocation4], 1
    %19 = vsyncpa %s18, 0
    %20 = vsyncpa [#allocation10], 0
    %s21 = scalar_lea.sflag [#allocation10], 1
    %22 = vsyncpa %s21, 0
    loop: start=0, step=1, limit=4
    $region2: #{tpu_custom_call.1} parent=1 // loop_pre_header
      _
    $region3: #{tpu_custom_call.1} parent=1 // loop_header
      %s24 = sphi 0, %s28
      %p25 = scmp.ge.s32.totalorder %s24, 4
      %s31 = sphi 0, %s43
      %s32 = sphi 0, %s39
      %s33 = sphi 0, %s31
      %s34 = sphi 0, %s32
      %s35 = sphi 0, %s33
      %s36 = sphi 0, %s34
      %s48 = sphi 0, %s50
      %s51 = sphi 0, %s48
      %s52 = sphi 0, %s51
      %s68 = sphi 0, %s52
      %s74 = sphi 0, %s76
      %s77 = sphi 0, %s74
      %s78 = sphi 0, %s77
      %s94 = sphi 0, %s78
      %s100 = sphi 0, %s102
      %s103 = sphi 0, %s100
      %s104 = sphi 0, %s103
      %s120 = sphi 0, %s104
      %s126 = sphi 0, %s128
      %s129 = sphi 0, %s126
      %s130 = sphi 0, %s129
      %s146 = sphi 0, %s130
      %s154 = sphi 0, %s156
      %s157 = sphi 0, %s154
      %s158 = sphi 0, %s157
      %s174 = sphi 0, %s158
      %s182 = sphi 0, %s184
      %s185 = sphi 0, %s182
      %s186 = sphi 0, %s185
      %s202 = sphi 0, %s186
    $region4: #{tpu_custom_call.1} parent=1 // loop_header_branch
      %27 = sbr.rel (%p25) target = $region8
    $region5: #{tpu_custom_call.1} parent=1 // loop_body
      %s29 = ssub.s32 %s24, 1
      %s30 = ssub.s32 %s24, 2
      %s37 = sadd.s32 1, %s32
      %p38 = scmp.ge.s32.totalorder %s37, 1
      %s39 = scalar_select %p38, 0, %s37
      %s40 = sadd.s32 1, %s31
      %s41 = scalar_select %p38, %s40, %s31
      %p42 = scmp.ge.s32.totalorder %s41, 2
      %s43 = scalar_select %p42, 0, %s41
      %s44 = ssub.s32 %s31, %s43
      %s45 = ssub.s32 %s32, %s39
      %s46 = sor.u32 %s44, %s45
      %p47 = scmp.eq.s32.totalorder %s46, 0
      %s49 = sadd.s32 %s48, 1
      %s50 = scalar_select %p47, %s48, %s49
      %p53 = pneg %p47
      %p54 = scmp.eq.s32.totalorder %s24, 1
      %p55 = por %p53, %p54
      %p56 = scmp.ne.s32.totalorder %s48, %s51
      %p57 = scmp.eq.s32.totalorder %s24, 0
      %p58 = por %p56, %p57
      %p59 = scmp.ne.s32.totalorder %s48, %s51
      %p60 = scmp.eq.s32.totalorder %s29, 1
      %p61 = por %p59, %p60
      %p62 = scmp.ne.s32.totalorder %s51, %s52
      %p63 = scmp.eq.s32.totalorder %s29, 0
      %p64 = por %p62, %p63
      %p65 = scmp.ne.s32.totalorder %s51, %s52
      %p66 = scmp.eq.s32.totalorder %s30, 1
      %p67 = por %p65, %p66
      %p69 = scmp.ne.s32.totalorder %s52, %s68
      %p70 = scmp.eq.s32.totalorder %s30, 0
      %p71 = por %p69, %p70
      %s72 = ssub.s32 %s31, %s43
      %p73 = scmp.eq.s32.totalorder %s72, 0
      %s75 = sadd.s32 %s74, 1
      %s76 = scalar_select %p73, %s74, %s75
      %p79 = pneg %p73
      %p80 = scmp.eq.s32.totalorder %s24, 1
      %p81 = por %p79, %p80
      %p82 = scmp.ne.s32.totalorder %s74, %s77
      %p83 = scmp.eq.s32.totalorder %s24, 0
      %p84 = por %p82, %p83
      %p85 = scmp.ne.s32.totalorder %s74, %s77
      %p86 = scmp.eq.s32.totalorder %s29, 1
      %p87 = por %p85, %p86
      %p88 = scmp.ne.s32.totalorder %s77, %s78
      %p89 = scmp.eq.s32.totalorder %s29, 0
      %p90 = por %p88, %p89
      %p91 = scmp.ne.s32.totalorder %s77, %s78
      %p92 = scmp.eq.s32.totalorder %s30, 1
      %p93 = por %p91, %p92
      %p95 = scmp.ne.s32.totalorder %s78, %s94
      %p96 = scmp.eq.s32.totalorder %s30, 0
      %p97 = por %p95, %p96
      %s98 = ssub.s32 %s31, %s43
      %p99 = scmp.eq.s32.totalorder %s98, 0
      %s101 = sadd.s32 %s100, 1
      %s102 = scalar_select %p99, %s100, %s101
      %p105 = pneg %p99
      %p106 = scmp.eq.s32.totalorder %s24, 1
      %p107 = por %p105, %p106
      %p108 = scmp.ne.s32.totalorder %s100, %s103
      %p109 = scmp.eq.s32.totalorder %s24, 0
      %p110 = por %p108, %p109
      %p111 = scmp.ne.s32.totalorder %s100, %s103
      %p112 = scmp.eq.s32.totalorder %s29, 1
      %p113 = por %p111, %p112
      %p114 = scmp.ne.s32.totalorder %s103, %s104
      %p115 = scmp.eq.s32.totalorder %s29, 0
      %p116 = por %p114, %p115
      %p117 = scmp.ne.s32.totalorder %s103, %s104
      %p118 = scmp.eq.s32.totalorder %s30, 1
      %p119 = por %p117, %p118
      %p121 = scmp.ne.s32.totalorder %s104, %s120
      %p122 = scmp.eq.s32.totalorder %s30, 0
      %p123 = por %p121, %p122
      %s124 = ssub.s32 %s31, %s43
      %p125 = scmp.eq.s32.totalorder %s124, 0
      %s127 = sadd.s32 %s126, 1
      %s128 = scalar_select %p125, %s126, %s127
      %p131 = pneg %p125
      %p132 = scmp.eq.s32.totalorder %s24, 1
      %p133 = por %p131, %p132
      %p134 = scmp.ne.s32.totalorder %s126, %s129
      %p135 = scmp.eq.s32.totalorder %s24, 0
      %p136 = por %p134, %p135
      %p137 = scmp.ne.s32.totalorder %s126, %s129
      %p138 = scmp.eq.s32.totalorder %s29, 1
      %p139 = por %p137, %p138
      %p140 = scmp.ne.s32.totalorder %s129, %s130
      %p141 = scmp.eq.s32.totalorder %s29, 0
      %p142 = por %p140, %p141
      %p143 = scmp.ne.s32.totalorder %s129, %s130
      %p144 = scmp.eq.s32.totalorder %s30, 1
      %p145 = por %p143, %p144
      %p147 = scmp.ne.s32.totalorder %s130, %s146
      %p148 = scmp.eq.s32.totalorder %s30, 0
      %p149 = por %p147, %p148
      %s150 = ssub.s32 %s31, %s43
      %s151 = ssub.s32 %s32, %s39
      %s152 = sor.u32 %s150, %s151
      %p153 = scmp.eq.s32.totalorder %s152, 0
      %s155 = sadd.s32 %s154, 1
      %s156 = scalar_select %p153, %s154, %s155
      %p159 = pneg %p153
      %p160 = scmp.eq.s32.totalorder %s24, 1
      %p161 = por %p159, %p160
      %p162 = scmp.ne.s32.totalorder %s154, %s157
      %p163 = scmp.eq.s32.totalorder %s24, 0
      %p164 = por %p162, %p163
      %p165 = scmp.ne.s32.totalorder %s154, %s157
      %p166 = scmp.eq.s32.totalorder %s29, 1
      %p167 = por %p165, %p166
      %p168 = scmp.ne.s32.totalorder %s157, %s158
      %p169 = scmp.eq.s32.totalorder %s29, 0
      %p170 = por %p168, %p169
      %p171 = scmp.ne.s32.totalorder %s157, %s158
      %p172 = scmp.eq.s32.totalorder %s30, 1
      %p173 = por %p171, %p172
      %p175 = scmp.ne.s32.totalorder %s158, %s174
      %p176 = scmp.eq.s32.totalorder %s30, 0
      %p177 = por %p175, %p176
      %s178 = ssub.s32 %s31, %s43
      %s179 = ssub.s32 %s32, %s39
      %s180 = sor.u32 %s178, %s179
      %p181 = scmp.eq.s32.totalorder %s180, 0
      %s183 = sadd.s32 %s182, 1
      %s184 = scalar_select %p181, %s182, %s183
      %p187 = pneg %p181
      %p188 = scmp.eq.s32.totalorder %s24, 1
      %p189 = por %p187, %p188
      %p190 = scmp.ne.s32.totalorder %s182, %s185
      %p191 = scmp.eq.s32.totalorder %s24, 0
      %p192 = por %p190, %p191
      %p193 = scmp.ne.s32.totalorder %s182, %s185
      %p194 = scmp.eq.s32.totalorder %s29, 1
      %p195 = por %p193, %p194
      %p196 = scmp.ne.s32.totalorder %s185, %s186
      %p197 = scmp.eq.s32.totalorder %s29, 0
      %p198 = por %p196, %p197
      %p199 = scmp.ne.s32.totalorder %s185, %s186
      %p200 = scmp.eq.s32.totalorder %s30, 1
      %p201 = por %p199, %p200
      %p203 = scmp.ne.s32.totalorder %s186, %s202
      %p204 = scmp.eq.s32.totalorder %s30, 0
      %p205 = por %p203, %p204
      %p206 = scmp.le.s32.totalorder 1, %s24
      %p207 = scmp.lt.s32.totalorder %s24, 3
      %p208 = pnand %p206, %p207
      %p209 = pneg %p208
      // Predicated region
      $region9: #{tpu_custom_call.1} parent=5 // pred_check
        _
      $region10: #{tpu_custom_call.1} parent=5 // pred_check_branch
        %211 = sbr.rel (%p208) target = $region12
      $region11: #{tpu_custom_call.1} parent=5 // pred_region
        %s212 = ssub.s32 %s24, 1
      $region12: #{tpu_custom_call.1} parent=5 // pred_fallthru
        _
      %p213 = scmp.lt.s32.totalorder %s24, 2
      // Predicated region
      $region13: #{tpu_custom_call.1} parent=5 // pred_check
        %p214 = pneg %p213
      $region14: #{tpu_custom_call.1} parent=5 // pred_check_branch
        %216 = sbr.rel (%p214) target = $region16
      $region15: #{tpu_custom_call.1} parent=5 // pred_region
        // Predicated region
        $region17: #{tpu_custom_call.1} parent=15 // pred_check
          %p217 = pneg %p58
        $region18: #{tpu_custom_call.1} parent=15 // pred_check_branch
          %219 = sbr.rel (%p217) target = $region20
        $region19: #{tpu_custom_call.1} parent=15 // pred_region
          %s220 = sand.u32 %s48, 1
          %s221 = scalar_lea.sflag [#allocation3], %s220
          %s222 = sand.u32 %s48, 1
          %s223 = smul.addr %s222, 16
          %s224 = scalar_lea.vmem [#allocation2], %s223
          %s225 = smul.u32 2, %s31
          %s227 = ssub.s32 256, 256
          %228 = vsyncadd %s221, %s227
          %s229 = sadd.s32 %s32, %s225
          %s230 = smul.addr %s229, 128
          %s231 = scalar_lea.hbm %s0, %s230
          %s232 = sshll.u32 %s224, 4
          %s233 = int_to_ptr.vmem [resolvable:$true] %s232
          %238 = dma.hbm_to_vmem [thread:$0]  %s231, 256, %s233, %s221, 128, 128, 8
        $region20: #{tpu_custom_call.1} parent=15 // pred_fallthru
          _
        // Predicated region
        $region21: #{tpu_custom_call.1} parent=15 // pred_check
          %p239 = pneg %p84
        $region22: #{tpu_custom_call.1} parent=15 // pred_check_branch
          %241 = sbr.rel (%p239) target = $region24
        $region23: #{tpu_custom_call.1} parent=15 // pred_region
          %s242 = sand.u32 %s24, 1
          %s243 = scalar_lea.sflag [#allocation6], %s242
          %s244 = sand.u32 %s74, 1
          %s245 = smul.addr %s244, 16
          %s246 = scalar_lea.vmem [#allocation5], %s245
          %s247 = smul.u32 2, %s31
          %s249 = ssub.s32 256, 256
          %250 = vsyncadd %s243, %s249
          %s251 = smul.addr %s247, 128
          %s252 = scalar_lea.hbm %s1, %s251
          %s253 = sshll.u32 %s246, 4
          %s254 = int_to_ptr.vmem [resolvable:$true] %s253
          %259 = dma.hbm_to_vmem [thread:$0]  %s252, 256, %s254, %s243, 128, 128, 8
        $region24: #{tpu_custom_call.1} parent=15 // pred_fallthru
          _
        // Predicated region
        $region25: #{tpu_custom_call.1} parent=15 // pred_check
          %p260 = pneg %p110
        $region26: #{tpu_custom_call.1} parent=15 // pred_check_branch
          %262 = sbr.rel (%p260) target = $region28
        $region27: #{tpu_custom_call.1} parent=15 // pred_region
          %s263 = sand.u32 %s24, 1
          %s264 = scalar_lea.sflag [#allocation6], %s263
          %s265 = sand.u32 %s100, 1
          %s266 = smul.addr %s265, 16
          %s267 = scalar_lea.vmem [#allocation7], %s266
          %s268 = smul.u32 2, %s31
          %s270 = ssub.s32 256, 256
          %271 = vsyncadd %s264, %s270
          %s272 = smul.addr %s268, 128
          %s273 = scalar_lea.hbm %s2, %s272
          %s274 = sshll.u32 %s267, 4
          %s275 = int_to_ptr.vmem [resolvable:$true] %s274
          %280 = dma.hbm_to_vmem [thread:$0]  %s273, 256, %s275, %s264, 128, 128, 8
        $region28: #{tpu_custom_call.1} parent=15 // pred_fallthru
          _
        // Predicated region
        $region29: #{tpu_custom_call.1} parent=15 // pred_check
          %p281 = pneg %p136
        $region30: #{tpu_custom_call.1} parent=15 // pred_check_branch
          %283 = sbr.rel (%p281) target = $region32
        $region31: #{tpu_custom_call.1} parent=15 // pred_region
          %s284 = smul.u32 2, %s31
          %p285 = scmp.lt.s32.totalorder %s284, 3
          %s286 = scalar_select %p285, %s284, 3
          %s287 = scalar_lea.vmem %s3, %s286
          %s288 = smul.u32 2, %s31
        $region32: #{tpu_custom_call.1} parent=15 // pred_fallthru
          _
      $region16: #{tpu_custom_call.1} parent=5 // pred_fallthru
        _
      %p289 = scmp.le.s32.totalorder 1, %s24
      %p290 = scmp.lt.s32.totalorder %s24, 3
      %p291 = pnand %p289, %p290
      %p292 = pneg %p291
      // Predicated region
      $region33: #{tpu_custom_call.1} parent=5 // pred_check
        _
      $region34: #{tpu_custom_call.1} parent=5 // pred_check_branch
        %294 = sbr.rel (%p291) target = $region36
      $region35: #{tpu_custom_call.1} parent=5 // pred_region
        %s295 = ssub.s32 %s24, 1
        %s296 = sand.u32 %s51, 1
        %s297 = scalar_lea.sflag [#allocation3], %s296
        %s298 = sand.u32 %s51, 1
        %s299 = smul.addr %s298, 16
        %s300 = scalar_lea.vmem [#allocation2], %s299
        // Predicated region
        $region37: #{tpu_custom_call.1} parent=35 // pred_check
          %p301 = pneg %p64
        $region38: #{tpu_custom_call.1} parent=35 // pred_check_branch
          %303 = sbr.rel (%p301) target = $region40
        $region39: #{tpu_custom_call.1} parent=35 // pred_region
          %304 = dma.done %s297, 256
        $region40: #{tpu_custom_call.1} parent=35 // pred_fallthru
          _
        %s305 = sand.u32 %s29, 1
        %s306 = scalar_lea.sflag [#allocation6], %s305
        %s307 = sand.u32 %s77, 1
        %s308 = smul.addr %s307, 16
        %s309 = scalar_lea.vmem [#allocation5], %s308
        // Predicated region
        $region41: #{tpu_custom_call.1} parent=35 // pred_check
          %p310 = pneg %p90
        $region42: #{tpu_custom_call.1} parent=35 // pred_check_branch
          %312 = sbr.rel (%p310) target = $region44
        $region43: #{tpu_custom_call.1} parent=35 // pred_region
          %313 = dma.done %s306, 256
        $region44: #{tpu_custom_call.1} parent=35 // pred_fallthru
          _
        %s314 = sand.u32 %s29, 1
        %s315 = scalar_lea.sflag [#allocation6], %s314
        %s316 = sand.u32 %s103, 1
        %s317 = smul.addr %s316, 16
        %s318 = scalar_lea.vmem [#allocation7], %s317
        // Predicated region
        $region45: #{tpu_custom_call.1} parent=35 // pred_check
          %p319 = pneg %p116
        $region46: #{tpu_custom_call.1} parent=35 // pred_check_branch
          %321 = sbr.rel (%p319) target = $region48
        $region47: #{tpu_custom_call.1} parent=35 // pred_region
          %322 = dma.done %s315, 256
        $region48: #{tpu_custom_call.1} parent=35 // pred_fallthru
          _
        %s323 = sand.u32 %s51, 1
        %s324 = scalar_lea.sflag [#allocation3], %s323
        %s325 = sand.u32 %s51, 1
        %s326 = smul.addr %s325, 16
        %s327 = scalar_lea.vmem [#allocation2], %s326
        %p328 = pneg %p64
        %p329 = pneg %p61
        %s330 = sand.u32 %s29, 1
        %s331 = scalar_lea.sflag [#allocation6], %s330
        %s332 = sand.u32 %s77, 1
        %s333 = smul.addr %s332, 16
        %s334 = scalar_lea.vmem [#allocation5], %s333
        %p335 = pneg %p90
        %p336 = pneg %p87
        %s337 = sand.u32 %s29, 1
        %s338 = scalar_lea.sflag [#allocation6], %s337
        %s339 = sand.u32 %s103, 1
        %s340 = smul.addr %s339, 16
        %s341 = scalar_lea.vmem [#allocation7], %s340
        %p342 = pneg %p116
        %p343 = pneg %p113
        %s344 = smul.u32 2, %s33
        %p345 = scmp.lt.s32.totalorder %s344, 3
        %s346 = scalar_select %p345, %s344, 3
        %s347 = scalar_lea.vmem %s3, %s346
        %p348 = pneg %p142
        %p349 = pneg %p139
        %p350 = pneg %p170
        %p351 = pneg %p167
        %s352 = sand.u32 %s157, 1
        %s353 = scalar_lea.sflag [#allocation4], %s352
        %s354 = sand.u32 %s157, 1
        %s355 = smul.addr %s354, 8
        %s356 = scalar_lea.vmem [#allocation8], %s355
        %p357 = pneg %p198
        %p358 = pneg %p195
        %s359 = sand.u32 %s185, 1
        %s360 = scalar_lea.sflag [#allocation10], %s359
        %s361 = sand.u32 %s185, 1
        %s362 = smul.addr %s361, 16
        %s363 = scalar_lea.vmem [#allocation9], %s362
        %s364 = smul.u32 2, %s33
        %s365 = smul.u32 2, %s33
        %s366 = smul.u32 2, %s33
        %s367 = smul.u32 2, %s33
        %p368 = scmp.lt.s32.totalorder %s367, 3
        %s369 = scalar_select %p368, %s367, 3
        %s370 = scalar_lea.vmem %s3, %s369
        %s371 = smul.u32 2, %s33
        %s372 = smul.u32 2, %s33
        %v375 = vld [vmem:[%s300] sm:$0xff]
        %v376 = vld [vmem:[%s300 + $0x8] sm:$0xff]
        %v377 = vld [vmem:[%s309] sm:$0xff]
        %v378 = vld [vmem:[%s309 + $0x8] sm:$0xff]
        %v379 = vld [vmem:[%s318] sm:$0xff]
        %v380 = vld [vmem:[%s318 + $0x8] sm:$0xff]
        %v381 = vld [vmem:[%s370] sm:$0x1]
        %v382 = vld [vmem:[%s370 + $0x1] sm:$0x1]
        %vm383 = vcmask 130048
        %v385 = vsel %vm383, %v375, 0
        %v388 = vsel %vm383, %v377, 0
        %390 = vmatprep.subr.mxu0 0.0
        %391 = vmatpush1.xpose.msra.mxu0 %v388
        %392 = vmatprep.subr.mxu0 0.0
        %393 = vmatpush1.xpose.msra.mxu0 0.0
        %394 = vmatprep.subr.mxu0 0.0
        %395 = vmatpush1.xpose.msra.mxu0 0.0
        %396 = vmatprep.subr.mxu0 0.0
        %397 = vmatpush1.xpose.msra.mxu0 0.0
        %398 = vmatprep.subr.mxu0 0.0
        %399 = vmatpush1.xpose.msra.mxu0 0.0
        %400 = vmatprep.subr.mxu0 0.0
        %401 = vmatpush1.xpose.msra.mxu0 0.0
        %402 = vmatprep.subr.mxu0 0.0
        %403 = vmatpush1.xpose.msra.mxu0 0.0
        %404 = vmatprep.subr.mxu0 0.0
        %405 = vmatpush1.xpose.msra.mxu0 0.0
        %406 = vmatprep.subr.mxu0 0.0
        %407 = vmatpush1.xpose.msra.mxu0 0.0
        %408 = vmatprep.subr.mxu0 0.0
        %409 = vmatpush1.xpose.msra.mxu0 0.0
        %410 = vmatprep.subr.mxu0 0.0
        %411 = vmatpush1.xpose.msra.mxu0 0.0
        %412 = vmatprep.subr.mxu0 0.0
        %413 = vmatpush1.xpose.msra.mxu0 0.0
        %414 = vmatprep.subr.mxu0 0.0
        %415 = vmatpush1.xpose.msra.mxu0 0.0
        %416 = vmatprep.subr.mxu0 0.0
        %417 = vmatpush1.xpose.msra.mxu0 0.0
        %418 = vmatprep.subr.mxu0 0.0
        %419 = vmatpush1.xpose.msra.mxu0 0.0
        %420 = vmatprep.subr.mxu0 0.0
        %421 = vmatpush1.xpose.msra.mxu0 0.0
        %422 = vmatprep.subr.mxu0 0.0
        %423 = vmatpush1.xpose.msra.mxu0 0.0
        %424 = vmatprep.subr.mxu0 0.0
        %425 = vmatpush1.xpose.msra.mxu0 0.0
        %426 = vmatprep.subr.mxu0 0.0
        %427 = vmatpush1.xpose.msra.mxu0 0.0
        %428 = vmatprep.subr.mxu0 0.0
        %429 = vmatpush1.xpose.msra.mxu0 0.0
        %430 = vmatprep.subr.mxu0 0.0
        %431 = vmatpush1.xpose.msra.mxu0 0.0
        %432 = vmatprep.subr.mxu0 0.0
        %433 = vmatpush1.xpose.msra.mxu0 0.0
        %434 = vmatprep.subr.mxu0 0.0
        %435 = vmatpush1.xpose.msra.mxu0 0.0
        %436 = vmatprep.subr.mxu0 0.0
        %437 = vmatpush1.xpose.msra.mxu0 0.0
        %438 = vmatprep.subr.mxu0 0.0
        %439 = vmatpush1.xpose.msra.mxu0 0.0
        %440 = vmatprep.subr.mxu0 0.0
        %441 = vmatpush1.xpose.msra.mxu0 0.0
        %442 = vmatprep.subr.mxu0 0.0
        %443 = vmatpush1.xpose.msra.mxu0 0.0
        %444 = vmatprep.subr.mxu0 0.0
        %445 = vmatpush1.xpose.msra.mxu0 0.0
        %446 = vmatprep.subr.mxu0 0.0
        %447 = vmatpush1.xpose.msra.mxu0 0.0
        %448 = vmatprep.subr.mxu0 0.0
        %449 = vmatpush1.xpose.msra.mxu0 0.0
        %450 = vmatprep.subr.mxu0 0.0
        %451 = vmatpush1.xpose.msra.mxu0 0.0
        %452 = vmatprep.subr.mxu0 0.0
        %453 = vmatpush1.xpose.msra.mxu0 0.0
        %454 = vmatprep.mubr.f32.mxu0 0.0
        %455 = vmatmul.mubr.f32.gmra.mrb[0].mxu0 %v385
        %v456 = vpop.f32.mrb[0].mxu0
        %v457 = vadd.f32 0.0, %v456
        %v458 = vpop.f32.mrb[0].mxu0
        %459 = vdwg.mxu0
        %v461 = vsel %vm383, %v376, 0
        %v464 = vsel %vm383, %v378, 0
        %466 = vmatprep.subr.mxu0 0.0
        %467 = vmatpush1.xpose.msra.mxu0 %v464
        %468 = vmatprep.subr.mxu0 0.0
        %469 = vmatpush1.xpose.msra.mxu0 0.0
        %470 = vmatprep.subr.mxu0 0.0
        %471 = vmatpush1.xpose.msra.mxu0 0.0
        %472 = vmatprep.subr.mxu0 0.0
        %473 = vmatpush1.xpose.msra.mxu0 0.0
        %474 = vmatprep.subr.mxu0 0.0
        %475 = vmatpush1.xpose.msra.mxu0 0.0
        %476 = vmatprep.subr.mxu0 0.0
        %477 = vmatpush1.xpose.msra.mxu0 0.0
        %478 = vmatprep.subr.mxu0 0.0
        %479 = vmatpush1.xpose.msra.mxu0 0.0
        %480 = vmatprep.subr.mxu0 0.0
        %481 = vmatpush1.xpose.msra.mxu0 0.0
        %482 = vmatprep.subr.mxu0 0.0
        %483 = vmatpush1.xpose.msra.mxu0 0.0
        %484 = vmatprep.subr.mxu0 0.0
        %485 = vmatpush1.xpose.msra.mxu0 0.0
        %486 = vmatprep.subr.mxu0 0.0
        %487 = vmatpush1.xpose.msra.mxu0 0.0
        %488 = vmatprep.subr.mxu0 0.0
        %489 = vmatpush1.xpose.msra.mxu0 0.0
        %490 = vmatprep.subr.mxu0 0.0
        %491 = vmatpush1.xpose.msra.mxu0 0.0
        %492 = vmatprep.subr.mxu0 0.0
        %493 = vmatpush1.xpose.msra.mxu0 0.0
        %494 = vmatprep.subr.mxu0 0.0
        %495 = vmatpush1.xpose.msra.mxu0 0.0
        %496 = vmatprep.subr.mxu0 0.0
        %497 = vmatpush1.xpose.msra.mxu0 0.0
        %498 = vmatprep.subr.mxu0 0.0
        %499 = vmatpush1.xpose.msra.mxu0 0.0
        %500 = vmatprep.subr.mxu0 0.0
        %501 = vmatpush1.xpose.msra.mxu0 0.0
        %502 = vmatprep.subr.mxu0 0.0
        %503 = vmatpush1.xpose.msra.mxu0 0.0
        %504 = vmatprep.subr.mxu0 0.0
        %505 = vmatpush1.xpose.msra.mxu0 0.0
        %506 = vmatprep.subr.mxu0 0.0
        %507 = vmatpush1.xpose.msra.mxu0 0.0
        %508 = vmatprep.subr.mxu0 0.0
        %509 = vmatpush1.xpose.msra.mxu0 0.0
        %510 = vmatprep.subr.mxu0 0.0
        %511 = vmatpush1.xpose.msra.mxu0 0.0
        %512 = vmatprep.subr.mxu0 0.0
        %513 = vmatpush1.xpose.msra.mxu0 0.0
        %514 = vmatprep.subr.mxu0 0.0
        %515 = vmatpush1.xpose.msra.mxu0 0.0
        %516 = vmatprep.subr.mxu0 0.0
        %517 = vmatpush1.xpose.msra.mxu0 0.0
        %518 = vmatprep.subr.mxu0 0.0
        %519 = vmatpush1.xpose.msra.mxu0 0.0
        %520 = vmatprep.subr.mxu0 0.0
        %521 = vmatpush1.xpose.msra.mxu0 0.0
        %522 = vmatprep.subr.mxu0 0.0
        %523 = vmatpush1.xpose.msra.mxu0 0.0
        %524 = vmatprep.subr.mxu0 0.0
        %525 = vmatpush1.xpose.msra.mxu0 0.0
        %526 = vmatprep.subr.mxu0 0.0
        %527 = vmatpush1.xpose.msra.mxu0 0.0
        %528 = vmatprep.subr.mxu0 0.0
        %529 = vmatpush1.xpose.msra.mxu0 0.0
        %530 = vmatprep.mubr.f32.mxu0 0.0
        %531 = vmatmul.mubr.f32.gmra.mrb[0].mxu0 %v461
        %v532 = vpop.f32.mrb[0].mxu0
        %v533 = vadd.f32 0.0, %v532
        %v534 = vpop.f32.mrb[0].mxu0
        %535 = vdwg.mxu0
        %v536 = vmul.f32 %v457, 0.25
        %v537 = vmul.f32 %v533, 0.25
        %vm538 = vnez %v381
        %vm539 = vnez %v382
        %v540 = vsel %vm538, 16843009, 0
        %v541 = vsel %vm539, 16843009, 0
        %v542 = vunpack.c.0.s8 %v540
        %v543 = vunpack.c.0.s8 %v541
        %vm544 = vcmp.ne.s32.totalorder %v542, 0
        %vm545 = vcmp.ne.s32.totalorder %v543, 0
        %v546 = vsel %vm544, 1, 0
        %v547 = vsel %vm545, 1, 0
        %v548 = vlaneseq
        %v549 = vshrl.u32 %v548, 7
        %v550 = vsub.s32 0, %v549
        %v551 = vrot.slane %v546, %v550
        %v552 = vlaneseq
        %v553 = vshrl.u32 %v552, 7
        %v554 = vsub.s32 0, %v553
        %v555 = vrot.slane %v547, %v554
        %vm556 = vcmp.eq.s32.totalorder %v551, 1
        %vm557 = vcmp.eq.s32.totalorder %v555, 1
        %v558 = vsel %vm556, -1e+09, %v536
        %v559 = vsel %vm557, -1e+09, %v537
        %vm560 = vcmask 64512
        %v561 = vsel %vm560, %v558, -inf
        %562 = vmax.xlane.f32.xlu0 %v561
        %v563 = vpop.xlane.xlu0 %562
        %v564 = vsel %vm560, %v559, -inf
        %565 = vmax.xlane.f32.xlu0 %v564
        %v566 = vpop.xlane.xlu0 %565
        %v567 = vsub.f32 %v558, %v563
        %v568 = vsub.f32 %v559, %v566
        %v569 = vmul.f32 %v567, 1.442695
        %v570 = vpow.pop %v569
        %v571 = vmul.f32 %v568, 1.442695
        %v572 = vpow.pop %v571
        %v573 = vsel %vm560, %v570, 0.0
        %574 = vadd.xlane.f32.xlu0 %v573
        %v575 = vpop.xlane.xlu0 %574
        %v576 = vsel %vm560, %v572, 0.0
        %577 = vadd.xlane.f32.xlu0 %v576
        %v578 = vpop.xlane.xlu0 %577
        %v579 = vrcp.pop %v575
        %v580 = vrcp.pop %v578
        %v581 = vmul.f32 %v570, %v579
        %v582 = vmul.f32 %v572, %v580
        %583 = vst.msk [vmem:[%s363] sm:$0xff] %vm560, %v581
        %584 = vst.msk [vmem:[%s363 + $0x8] sm:$0xff] %vm560, %v582
        %v586 = vsel %vm560, %v581, 0
        %588 = vmatprep.subr.mxu0 0.0
        %589 = vmatpush1.msra.mxu0 %v379
        %590 = vmatprep.subr.mxu0 0.0
        %591 = vmatpush1.msra.mxu0 0.0
        %592 = vmatprep.subr.mxu0 0.0
        %593 = vmatpush1.msra.mxu0 0.0
        %594 = vmatprep.subr.mxu0 0.0
        %595 = vmatpush1.msra.mxu0 0.0
        %596 = vmatprep.subr.mxu0 0.0
        %597 = vmatpush1.msra.mxu0 0.0
        %598 = vmatprep.subr.mxu0 0.0
        %599 = vmatpush1.msra.mxu0 0.0
        %600 = vmatprep.subr.mxu0 0.0
        %601 = vmatpush1.msra.mxu0 0.0
        %602 = vmatprep.subr.mxu0 0.0
        %603 = vmatpush1.msra.mxu0 0.0
        %604 = vmatprep.subr.mxu0 0.0
        %605 = vmatpush1.msra.mxu0 0.0
        %606 = vmatprep.subr.mxu0 0.0
        %607 = vmatpush1.msra.mxu0 0.0
        %608 = vmatprep.subr.mxu0 0.0
        %609 = vmatpush1.msra.mxu0 0.0
        %610 = vmatprep.subr.mxu0 0.0
        %611 = vmatpush1.msra.mxu0 0.0
        %612 = vmatprep.subr.mxu0 0.0
        %613 = vmatpush1.msra.mxu0 0.0
        %614 = vmatprep.subr.mxu0 0.0
        %615 = vmatpush1.msra.mxu0 0.0
        %616 = vmatprep.subr.mxu0 0.0
        %617 = vmatpush1.msra.mxu0 0.0
        %618 = vmatprep.subr.mxu0 0.0
        %619 = vmatpush1.msra.mxu0 0.0
        %620 = vmatprep.subr.mxu0 0.0
        %621 = vmatpush1.msra.mxu0 0.0
        %622 = vmatprep.subr.mxu0 0.0
        %623 = vmatpush1.msra.mxu0 0.0
        %624 = vmatprep.subr.mxu0 0.0
        %625 = vmatpush1.msra.mxu0 0.0
        %626 = vmatprep.subr.mxu0 0.0
        %627 = vmatpush1.msra.mxu0 0.0
        %628 = vmatprep.subr.mxu0 0.0
        %629 = vmatpush1.msra.mxu0 0.0
        %630 = vmatprep.subr.mxu0 0.0
        %631 = vmatpush1.msra.mxu0 0.0
        %632 = vmatprep.subr.mxu0 0.0
        %633 = vmatpush1.msra.mxu0 0.0
        %634 = vmatprep.subr.mxu0 0.0
        %635 = vmatpush1.msra.mxu0 0.0
        %636 = vmatprep.subr.mxu0 0.0
        %637 = vmatpush1.msra.mxu0 0.0
        %638 = vmatprep.subr.mxu0 0.0
        %639 = vmatpush1.msra.mxu0 0.0
        %640 = vmatprep.subr.mxu0 0.0
        %641 = vmatpush1.msra.mxu0 0.0
        %642 = vmatprep.subr.mxu0 0.0
        %643 = vmatpush1.msra.mxu0 0.0
        %644 = vmatprep.subr.mxu0 0.0
        %645 = vmatpush1.msra.mxu0 0.0
        %646 = vmatprep.subr.mxu0 0.0
        %647 = vmatpush1.msra.mxu0 0.0
        %648 = vmatprep.subr.mxu0 0.0
        %649 = vmatpush1.msra.mxu0 0.0
        %650 = vmatprep.subr.mxu0 0.0
        %651 = vmatpush1.msra.mxu0 0.0
        %652 = vmatprep.mubr.f32.mxu0 0.0
        %653 = vmatmul.mubr.f32.gmra.mrb[0].mxu0 %v586
        %v654 = vpop.f32.mrb[0].mxu0
        %v655 = vadd.f32 0.0, %v654
        %v656 = vpop.f32.mrb[0].mxu0
        %657 = vdwg.mxu0
        %v659 = vsel %vm560, %v582, 0
        %661 = vmatprep.subr.mxu0 0.0
        %662 = vmatpush1.msra.mxu0 %v380
        %663 = vmatprep.subr.mxu0 0.0
        %664 = vmatpush1.msra.mxu0 0.0
        %665 = vmatprep.subr.mxu0 0.0
        %666 = vmatpush1.msra.mxu0 0.0
        %667 = vmatprep.subr.mxu0 0.0
        %668 = vmatpush1.msra.mxu0 0.0
        %669 = vmatprep.subr.mxu0 0.0
        %670 = vmatpush1.msra.mxu0 0.0
        %671 = vmatprep.subr.mxu0 0.0
        %672 = vmatpush1.msra.mxu0 0.0
        %673 = vmatprep.subr.mxu0 0.0
        %674 = vmatpush1.msra.mxu0 0.0
        %675 = vmatprep.subr.mxu0 0.0
        %676 = vmatpush1.msra.mxu0 0.0
        %677 = vmatprep.subr.mxu0 0.0
        %678 = vmatpush1.msra.mxu0 0.0
        %679 = vmatprep.subr.mxu0 0.0
        %680 = vmatpush1.msra.mxu0 0.0
        %681 = vmatprep.subr.mxu0 0.0
        %682 = vmatpush1.msra.mxu0 0.0
        %683 = vmatprep.subr.mxu0 0.0
        %684 = vmatpush1.msra.mxu0 0.0
        %685 = vmatprep.subr.mxu0 0.0
        %686 = vmatpush1.msra.mxu0 0.0
        %687 = vmatprep.subr.mxu0 0.0
        %688 = vmatpush1.msra.mxu0 0.0
        %689 = vmatprep.subr.mxu0 0.0
        %690 = vmatpush1.msra.mxu0 0.0
        %691 = vmatprep.subr.mxu0 0.0
        %692 = vmatpush1.msra.mxu0 0.0
        %693 = vmatprep.subr.mxu0 0.0
        %694 = vmatpush1.msra.mxu0 0.0
        %695 = vmatprep.subr.mxu0 0.0
        %696 = vmatpush1.msra.mxu0 0.0
        %697 = vmatprep.subr.mxu0 0.0
        %698 = vmatpush1.msra.mxu0 0.0
        %699 = vmatprep.subr.mxu0 0.0
        %700 = vmatpush1.msra.mxu0 0.0
        %701 = vmatprep.subr.mxu0 0.0
        %702 = vmatpush1.msra.mxu0 0.0
        %703 = vmatprep.subr.mxu0 0.0
        %704 = vmatpush1.msra.mxu0 0.0
        %705 = vmatprep.subr.mxu0 0.0
        %706 = vmatpush1.msra.mxu0 0.0
        %707 = vmatprep.subr.mxu0 0.0
        %708 = vmatpush1.msra.mxu0 0.0
        %709 = vmatprep.subr.mxu0 0.0
        %710 = vmatpush1.msra.mxu0 0.0
        %711 = vmatprep.subr.mxu0 0.0
        %712 = vmatpush1.msra.mxu0 0.0
        %713 = vmatprep.subr.mxu0 0.0
        %714 = vmatpush1.msra.mxu0 0.0
        %715 = vmatprep.subr.mxu0 0.0
        %716 = vmatpush1.msra.mxu0 0.0
        %717 = vmatprep.subr.mxu0 0.0
        %718 = vmatpush1.msra.mxu0 0.0
        %719 = vmatprep.subr.mxu0 0.0
        %720 = vmatpush1.msra.mxu0 0.0
        %721 = vmatprep.subr.mxu0 0.0
        %722 = vmatpush1.msra.mxu0 0.0
        %723 = vmatprep.subr.mxu0 0.0
        %724 = vmatpush1.msra.mxu0 0.0
        %725 = vmatprep.mubr.f32.mxu0 0.0
        %726 = vmatmul.mubr.f32.gmra.mrb[0].mxu0 %v659
        %v727 = vpop.f32.mrb[0].mxu0
        %v728 = vadd.f32 0.0, %v727
        %v729 = vpop.f32.mrb[0].mxu0
        %730 = vdwg.mxu0
        %732 = vrot.lane.b32.xlu0 %v728, 16
        %v733 = vpop.permute.xlu0 %732
        %v735 = vsel %vm383, %v655, %v733
        %vm736 = vcmask 261120
        %737 = vst.msk [vmem:[%s356] sm:$0xff] %vm736, %v735
        %s738 = sand.u32 %s157, 1
        %s739 = scalar_lea.sflag [#allocation4], %s738
        %s740 = sand.u32 %s157, 1
        %s741 = smul.addr %s740, 8
        %s742 = scalar_lea.vmem [#allocation8], %s741
        %s743 = sand.u32 %s185, 1
        %s744 = scalar_lea.sflag [#allocation10], %s743
        %s745 = sand.u32 %s185, 1
        %s746 = smul.addr %s745, 16
        %s747 = scalar_lea.vmem [#allocation9], %s746
        // Predicated region
        $region49: #{tpu_custom_call.1} parent=35 // pred_check
          %p748 = pneg %p167
        $region50: #{tpu_custom_call.1} parent=35 // pred_check_branch
          %750 = sbr.rel (%p748) target = $region52
        $region51: #{tpu_custom_call.1} parent=35 // pred_region
          %s752 = ssub.s32 128, 128
          %753 = vsyncadd %s739, %s752
          %s754 = sadd.s32 %s34, %s33
          %s755 = smul.addr %s754, 128
          %s756 = scalar_lea.hbm %s4, %s755
          %s758 = sshll.u32 %s742, 4
          %s759 = int_to_ptr.vmem [resolvable:$true] %s758
          %761 = dma.vmem_to_hbm [thread:$0]  %s759, 128, %s756, %s739
        $region52: #{tpu_custom_call.1} parent=35 // pred_fallthru
          _
        // Predicated region
        $region53: #{tpu_custom_call.1} parent=35 // pred_check
          %p762 = pneg %p195
        $region54: #{tpu_custom_call.1} parent=35 // pred_check_branch
          %764 = sbr.rel (%p762) target = $region56
        $region55: #{tpu_custom_call.1} parent=35 // pred_region
          %s765 = smul.u32 2, %s33
          %s767 = ssub.s32 256, 256
          %768 = vsyncadd %s744, %s767
          %s769 = sadd.s32 %s34, %s765
          %s770 = smul.addr %s769, 128
          %s771 = scalar_lea.hbm %s5, %s770
          %s772 = sshll.u32 %s747, 4
          %s773 = int_to_ptr.vmem [resolvable:$true] %s772
          %778 = dma.vmem_to_hbm [thread:$0]  %s773, 256, %s771, %s744, 128, 128, 8
        $region56: #{tpu_custom_call.1} parent=35 // pred_fallthru
          _
      $region36: #{tpu_custom_call.1} parent=5 // pred_fallthru
        _
      %p779 = scmp.le.s32.totalorder 2, %s24
      // Predicated region
      $region57: #{tpu_custom_call.1} parent=5 // pred_check
        %p780 = pneg %p779
      $region58: #{tpu_custom_call.1} parent=5 // pred_check_branch
        %782 = sbr.rel (%p780) target = $region60
      $region59: #{tpu_custom_call.1} parent=5 // pred_region
        %s783 = ssub.s32 %s24, 2
        // Predicated region
        $region61: #{tpu_custom_call.1} parent=59 // pred_check
          %p784 = pneg %p173
        $region62: #{tpu_custom_call.1} parent=59 // pred_check_branch
          %786 = sbr.rel (%p784) target = $region64
        $region63: #{tpu_custom_call.1} parent=59 // pred_region
          %s787 = sand.u32 %s158, 1
          %s788 = scalar_lea.sflag [#allocation4], %s787
          %s789 = sand.u32 %s158, 1
          %s790 = smul.addr %s789, 8
          %s791 = scalar_lea.vmem [#allocation8], %s790
          %792 = dma.done %s788, 128
        $region64: #{tpu_custom_call.1} parent=59 // pred_fallthru
          _
        // Predicated region
        $region65: #{tpu_custom_call.1} parent=59 // pred_check
          %p793 = pneg %p201
        $region66: #{tpu_custom_call.1} parent=59 // pred_check_branch
          %795 = sbr.rel (%p793) target = $region68
        $region67: #{tpu_custom_call.1} parent=59 // pred_region
          %s796 = sand.u32 %s186, 1
          %s797 = scalar_lea.sflag [#allocation10], %s796
          %s798 = sand.u32 %s186, 1
          %s799 = smul.addr %s798, 16
          %s800 = scalar_lea.vmem [#allocation9], %s799
          %801 = dma.done %s797, 256
        $region68: #{tpu_custom_call.1} parent=59 // pred_fallthru
          _
      $region60: #{tpu_custom_call.1} parent=5 // pred_fallthru
        _
    $region6: #{tpu_custom_call.1} parent=1 // loop_footer
      %s28 = sadd.s32 1, %s24
    $region7: #{tpu_custom_call.1} parent=1 // loop_footer_branch
      %23 = sbr.rel target = $region3
    $region8: #{tpu_custom_call.1} parent=1 // loop_exit
      _
    %802 = vsyncpa [#allocation3], 1
    %s803 = scalar_lea.sflag [#allocation3], 1
    %804 = vsyncpa %s803, 1
    %805 = vsyncpa [#allocation6], 1
    %s806 = scalar_lea.sflag [#allocation6], 1
    %807 = vsyncpa %s806, 1
    %808 = vsyncpa [#allocation4], 1
    %s809 = scalar_lea.sflag [#allocation4], 1
    %810 = vsyncpa %s809, 1
    %811 = vsyncpa [#allocation10], 1
    %s812 = scalar_lea.sflag [#allocation10], 1
    %813 = vsyncpa %s812, 1

</llo_original>
